<compile_context>
chip_gen: v7x
topology: tpu7x:2x2x1
jax: 0.10.0
libtpu: 0.0.40
codegen_flags: <defaults>
</compile_context>

<pallas_src>
import jax
import jax.numpy as jnp
from jax import lax
from jax.experimental import pallas as pl
from jax.experimental.pallas import tpu as pltpu


def stage_one_kernel(x_ref, w_ref, b_ref, o_ref):
    # x_ref: (TB, D)   w_ref: (4, D)   b_ref: (4, 1)   o_ref: (4, TB)
    x = x_ref[...]
    w = w_ref[...]
    b = b_ref[...]

    # y_T = W @ x^T + b : contract w dim 1 with x dim 1 (both lane-dense on D).
    # Result (4, TB) is lane-dense on the batch dim -> unmasked stores and a
    # contiguous writeback DMA.
    yt = lax.dot_general(
        w, x,
        dimension_numbers=(((1,), (1,)), ((), ())),
        preferred_element_type=jnp.float32,
    ) + b                                                        # (4, TB)

    # Softmax over rows 0..2 ("direction"); row 3 ("magnitude") passes through.
    # Row mask avoids sub-width slices / concat; exp argument is masked so the
    # dead row never produces inf.
    row = lax.broadcasted_iota(jnp.int32, yt.shape, dimension=0)
    dir_mask = row < 3
    neg_inf = jnp.float32(-jnp.inf)

    masked = jnp.where(dir_mask, yt, neg_inf)
    m = jnp.max(masked, axis=0, keepdims=True)                   # (1, TB)
    e = jnp.exp(jnp.where(dir_mask, yt - m, neg_inf))            # (4, TB)
    denom = jnp.sum(e, axis=0, keepdims=True)                    # (1, TB)
    soft = e / denom

    o_ref[...] = jnp.where(dir_mask, soft, yt).astype(o_ref.dtype)


def _pick_tb(batch, d, x_tile_budget_bytes=4 << 20):
    """Batch-tile (lane) size.

    - batch <= 128: single full-array block (block dims == array dims).
    - otherwise: multiple of 128 (lane-dense output), capped so a single x
      tile stays within ~4 MiB (HBM roofline saturates around 2-4 MiB tiles)
      and so there are at least 2 grid steps (v7x has 2 TensorCores).
    """
    if batch <= 128:
        return batch
    tb_bytes = max(1, x_tile_budget_bytes // (d * 4))   # rows per <=budget tile
    tb_split = pl.cdiv(batch, 2)                        # >= 2 tiles for megacore
    tb = min(tb_bytes, tb_split)
    tb = max(128, (tb // 128) * 128)
    return tb


def stage_one_forward(x, w, b, *, tb=None):
    """x: (B, D) f32; w: (4, D) f32 (native PyTorch Linear layout); b: (4,) f32."""
    B, D = x.shape
    if tb is None:
        tb = _pick_tb(B, D)
    grid = (pl.cdiv(B, tb),)

    # VMEM budget: double-buffered x and output tiles + resident w, b + slack.
    x_tile_bytes = tb * D * 4
    out_tile_bytes = 4 * tb * 4
    need = 2 * x_tile_bytes + 2 * out_tile_bytes + 4 * D * 4 + 4 * 4
    vmem_limit = int(min(max(2 * need + (4 << 20), 16 << 20), 64 << 20))

    out_t = pl.pallas_call(
        stage_one_kernel,
        out_shape=jax.ShapeDtypeStruct((4, B), jnp.float32),
        grid=grid,
        in_specs=[
            pl.BlockSpec((tb, D), lambda i: (i, 0)),   # x: tiled over batch
            pl.BlockSpec((4, D), lambda i: (0, 0)),    # w: resident across tiles
            pl.BlockSpec((4, 1), lambda i: (0, 0)),    # b: resident across tiles
        ],
        out_specs=pl.BlockSpec((4, tb), lambda i: (0, i)),  # lane-dense output
        compiler_params=pltpu.CompilerParams(
            dimension_semantics=("parallel",),
            vmem_limit_bytes=vmem_limit,
        ),
    )(x, w, b.reshape(4, 1))

    # Tiny (4, B) -> (B, 4) transpose in the wrapper restores module layout.
    return out_t.T


def stage_one_reference(x, w, b):
    y = x @ w.T + b
    d = jax.nn.softmax(y[:, :3], axis=1)
    m = y[:, 3:]
    return jnp.concatenate([d, m], axis=1)


if __name__ == "__main__":
    key = jax.random.PRNGKey(0)
    kx, kw, kb, kx2 = jax.random.split(key, 4)

    # --- Main check: the module's nominal small shape (batch=2, input_size=32)
    B, D = 2, 32
    x = jax.random.normal(kx, (B, D), dtype=jnp.float32)

    bound = 1.0 / jnp.sqrt(jnp.float32(D))
    w = jax.random.uniform(kw, (4, D), dtype=jnp.float32, minval=-bound, maxval=bound)
    b = jax.random.uniform(kb, (4,), dtype=jnp.float32, minval=-bound, maxval=bound)

    out = jax.block_until_ready(stage_one_forward(x, w, b))
    ref = stage_one_reference(x, w, b)
    assert out.shape == (B, 4)
    assert jnp.allclose(out, ref, atol=1e-5, rtol=1e-5), "mismatch vs reference (small)"

    # --- Secondary check: multi-tile grid + ragged (partial last block) path.
    B2, D2 = 300, 256
    x2 = jax.random.normal(kx2, (B2, D2), dtype=jnp.float32)
    bound2 = 1.0 / jnp.sqrt(jnp.float32(D2))
    w2 = jax.random.uniform(kw, (4, D2), dtype=jnp.float32, minval=-bound2, maxval=bound2)
    b2 = jax.random.uniform(kb, (4,), dtype=jnp.float32, minval=-bound2, maxval=bound2)

    out2 = jax.block_until_ready(stage_one_forward(x2, w2, b2))
    ref2 = stage_one_reference(x2, w2, b2)
    assert out2.shape == (B2, 4)
    assert jnp.allclose(out2, ref2, atol=1e-5, rtol=1e-5), "mismatch vs reference (tiled)"

    print("KERNEL_OK")
</pallas_src>

<mosaic_0001>
module attributes {stable_mosaic.version = 11 : i64} {
  func.func @stage_one_kernel(%arg0: i32, %arg1: memref<2x32xf32, #tpu.memory_space<vmem>>, %arg2: memref<4x32xf32, #tpu.memory_space<vmem>>, %arg3: memref<4x1xf32, #tpu.memory_space<vmem>>, %arg4: memref<4x2xf32, #tpu.memory_space<vmem>>) attributes {dimension_semantics = [#tpu.dimension_semantics<parallel>], iteration_bounds = array<i64: 1>, scalar_prefetch = 0 : i64, scratch_operands = 0 : i64, tpu.core_type = #tpu.core_type<tc>, window_params = [{transform_indices = @transform_0, window_bounds = array<i64: 2, 32>}, {pipeline_mode = #tpu.pipeline_mode<synchronous>, transform_indices = @transform_1, window_bounds = array<i64: 4, 32>}, {pipeline_mode = #tpu.pipeline_mode<synchronous>, transform_indices = @transform_2, window_bounds = array<i64: 4, 1>}, {transform_indices = @transform_3, window_bounds = array<i64: 4, 2>}]} {
    %c0 = arith.constant 0 : index
    %c0_0 = arith.constant 0 : index
    %0 = vector.load %arg1[%c0, %c0_0] : memref<2x32xf32, #tpu.memory_space<vmem>>, vector<2x32xf32>
    %c0_1 = arith.constant 0 : index
    %c0_2 = arith.constant 0 : index
    %1 = vector.load %arg2[%c0_1, %c0_2] : memref<4x32xf32, #tpu.memory_space<vmem>>, vector<4x32xf32>
    %c0_3 = arith.constant 0 : index
    %c0_4 = arith.constant 0 : index
    %2 = vector.load %arg3[%c0_3, %c0_4] : memref<4x1xf32, #tpu.memory_space<vmem>>, vector<4x1xf32>
    %cst = arith.constant dense<0.000000e+00> : vector<4x2xf32>
    %3 = tpu.matmul %1, %0, %cst {dimension_numbers = #tpu.dot_dimension_numbers<[1], [1], [0], [0], [0, 0, 1, 0], [], []>} : vector<4x32xf32>, vector<2x32xf32>, vector<4x2xf32> -> vector<4x2xf32>
    %4 = vector.broadcast %2 : vector<4x1xf32> to vector<4x2xf32>
    %5 = arith.addf %3, %4 : vector<4x2xf32>
    %6 = tpu.iota {dimensions = array<i32: 0>} : vector<4x2xi32>
    %c3_i32 = arith.constant 3 : i32
    %7 = vector.broadcast %c3_i32 : i32 to vector<4x2xi32>
    %8 = arith.cmpi slt, %6, %7 : vector<4x2xi32>
    %cst_5 = arith.constant 0xFF800000 : f32
    %9 = vector.broadcast %cst_5 : f32 to vector<4x2xf32>
    %10 = arith.select %8, %5, %9 : vector<4x2xi1>, vector<4x2xf32>
    %cst_6 = arith.constant dense<0xFF800000> : vector<2xf32>
    %11 = vector.multi_reduction <maximumf>, %10, %cst_6 [0] : vector<4x2xf32> to vector<2xf32>
    %12 = vector.shape_cast %11 : vector<2xf32> to vector<1x2xf32>
    %13 = vector.broadcast %12 : vector<1x2xf32> to vector<4x2xf32>
    %14 = arith.subf %5, %13 : vector<4x2xf32>
    %cst_7 = arith.constant 0xFF800000 : f32
    %15 = vector.broadcast %cst_7 : f32 to vector<4x2xf32>
    %16 = arith.select %8, %14, %15 : vector<4x2xi1>, vector<4x2xf32>
    %17 = math.exp %16 : vector<4x2xf32>
    %cst_8 = arith.constant dense<0.000000e+00> : vector<2xf32>
    %18 = vector.multi_reduction <add>, %17, %cst_8 [0] : vector<4x2xf32> to vector<2xf32>
    %19 = vector.shape_cast %18 : vector<2xf32> to vector<1x2xf32>
    %20 = vector.broadcast %19 : vector<1x2xf32> to vector<4x2xf32>
    %21 = arith.divf %17, %20 : vector<4x2xf32>
    %22 = arith.select %8, %21, %5 : vector<4x2xi1>, vector<4x2xf32>
    %c0_9 = arith.constant 0 : index
    %c0_10 = arith.constant 0 : index
    %23 = vector.load %arg4[%c0_9, %c0_10] : memref<4x2xf32, #tpu.memory_space<vmem>>, vector<4x2xf32>
    tpu.vector_store %arg4[%c0_9, %c0_10], %22 {strides = array<i32>} : memref<4x2xf32, #tpu.memory_space<vmem>>, vector<4x2xf32>,
    return
  }
  func.func @transform_0(%arg0: i32) -> (i32, i32) {
    %c0_i32 = arith.constant 0 : i32
    %c0_i32_0 = arith.constant 0 : i32
    return %arg0, %c0_i32 : i32, i32
  }
  func.func @transform_1(%arg0: i32) -> (i32, i32) {
    %c0_i32 = arith.constant 0 : i32
    %c0_i32_0 = arith.constant 0 : i32
    %c0_i32_1 = arith.constant 0 : i32
    return %c0_i32, %c0_i32_0 : i32, i32
  }
  func.func @transform_2(%arg0: i32) -> (i32, i32) {
    %c0_i32 = arith.constant 0 : i32
    %c0_i32_0 = arith.constant 0 : i32
    %c0_i32_1 = arith.constant 0 : i32
    return %c0_i32, %c0_i32_0 : i32, i32
  }
  func.func @transform_3(%arg0: i32) -> (i32, i32) {
    %c0_i32 = arith.constant 0 : i32
    %c0_i32_0 = arith.constant 0 : i32
    return %c0_i32, %arg0 : i32, i32
  }
}

</mosaic_0001>

<llo_original>
// kernel: tpu_custom_call.1
$region0: #{tpu_custom_call.1}
  #allocation0 [shape = 'u32[]', space=smem, size = 0x4, offset = 0x4, fixed_abs, tag = 'smem constant byte address 0x4 - core index']
  #allocation1 [shape = 'u32[144,128]{1,0:T(1,128)}', space=vmem, size = 0x12000, scoped, tag = 'internal scratch']
  %s0 = inlined_call_operand.vmem [shape: f32[2,32], index: 0, kind: input, shape index: {}]
  %s1 = inlined_call_operand.vmem [shape: f32[4,32], index: 1, kind: input, shape index: {}]
  %s2 = inlined_call_operand.vmem [shape: f32[4,1], index: 2, kind: input, shape index: {}]
  %s3 = inlined_call_operand.vmem [shape: f32[4,2], index: 3, kind: output, shape index: {}]
  %s4 = sld [smem:[#allocation0]]
  $region22: #{tpu_custom_call.1} parent=0
    _
  %s6 = ssub.s32 1, %s4
  %s7 = scalar_select 0, %s6, %s4
  // Predicated region
  $region2: #{tpu_custom_call.1} parent=0 // pred_check
    _
  $region3: #{tpu_custom_call.1} parent=0 // pred_check_branch
    %9 = sbr.rel (0) target = $region5
  $region4: #{tpu_custom_call.1} parent=0 // pred_region
    _
  $region5: #{tpu_custom_call.1} parent=0 // pred_fallthru
    _
  // Predicated region
  $region6: #{tpu_custom_call.1} parent=0 // pred_check
    _
  $region7: #{tpu_custom_call.1} parent=0 // pred_check_branch
    %11 = sbr.rel (0) target = $region9
  $region8: #{tpu_custom_call.1} parent=0 // pred_region
    _
  $region9: #{tpu_custom_call.1} parent=0 // pred_fallthru
    _
  // Predicated region
  $region10: #{tpu_custom_call.1} parent=0 // pred_check
    _
  $region11: #{tpu_custom_call.1} parent=0 // pred_check_branch
    %13 = sbr.rel (0) target = $region13
  $region12: #{tpu_custom_call.1} parent=0 // pred_region
    _
  $region13: #{tpu_custom_call.1} parent=0 // pred_fallthru
    _
  %v14 = vld [vmem:[%s0] sm:$0x3]
  %v15 = vld [vmem:[%s1] sm:$0xf]
  %v16 = vld [vmem:[%s2] sm:$0xf]
  %18 = vset.pattern.permute.xlu0 0
  %19 = vperm.xlu0 %18, %v16
  %v20 = vpop.permute.xlu0 %19
  %vm22 = vcmask 261120
  %v24 = vsel %vm22, %v15, 0
  %v27 = vsel %vm22, %v14, 0
  %29 = vmatprep.subr.mxu0 0.0
  %30 = vmatpush1.xpose.msra.mxu0 %v27
  %31 = vmatprep.subr.mxu0 0.0
  %32 = vmatpush1.xpose.msra.mxu0 0.0
  %33 = vmatprep.subr.mxu0 0.0
  %34 = vmatpush1.xpose.msra.mxu0 0.0
  %35 = vmatprep.subr.mxu0 0.0
  %36 = vmatpush1.xpose.msra.mxu0 0.0
  %37 = vmatprep.subr.mxu0 0.0
  %38 = vmatpush1.xpose.msra.mxu0 0.0
  %39 = vmatprep.subr.mxu0 0.0
  %40 = vmatpush1.xpose.msra.mxu0 0.0
  %41 = vmatprep.subr.mxu0 0.0
  %42 = vmatpush1.xpose.msra.mxu0 0.0
  %43 = vmatprep.subr.mxu0 0.0
  %44 = vmatpush1.xpose.msra.mxu0 0.0
  %45 = vmatprep.subr.mxu0 0.0
  %46 = vmatpush1.xpose.msra.mxu0 0.0
  %47 = vmatprep.subr.mxu0 0.0
  %48 = vmatpush1.xpose.msra.mxu0 0.0
  %49 = vmatprep.subr.mxu0 0.0
  %50 = vmatpush1.xpose.msra.mxu0 0.0
  %51 = vmatprep.subr.mxu0 0.0
  %52 = vmatpush1.xpose.msra.mxu0 0.0
  %53 = vmatprep.subr.mxu0 0.0
  %54 = vmatpush1.xpose.msra.mxu0 0.0
  %55 = vmatprep.subr.mxu0 0.0
  %56 = vmatpush1.xpose.msra.mxu0 0.0
  %57 = vmatprep.subr.mxu0 0.0
  %58 = vmatpush1.xpose.msra.mxu0 0.0
  %59 = vmatprep.subr.mxu0 0.0
  %60 = vmatpush1.xpose.msra.mxu0 0.0
  %61 = vmatprep.subr.mxu0 0.0
  %62 = vmatpush1.xpose.msra.mxu0 0.0
  %63 = vmatprep.subr.mxu0 0.0
  %64 = vmatpush1.xpose.msra.mxu0 0.0
  %65 = vmatprep.subr.mxu0 0.0
  %66 = vmatpush1.xpose.msra.mxu0 0.0
  %67 = vmatprep.subr.mxu0 0.0
  %68 = vmatpush1.xpose.msra.mxu0 0.0
  %69 = vmatprep.subr.mxu0 0.0
  %70 = vmatpush1.xpose.msra.mxu0 0.0
  %71 = vmatprep.subr.mxu0 0.0
  %72 = vmatpush1.xpose.msra.mxu0 0.0
  %73 = vmatprep.subr.mxu0 0.0
  %74 = vmatpush1.xpose.msra.mxu0 0.0
  %75 = vmatprep.subr.mxu0 0.0
  %76 = vmatpush1.xpose.msra.mxu0 0.0
  %77 = vmatprep.subr.mxu0 0.0
  %78 = vmatpush1.xpose.msra.mxu0 0.0
  %79 = vmatprep.subr.mxu0 0.0
  %80 = vmatpush1.xpose.msra.mxu0 0.0
  %81 = vmatprep.subr.mxu0 0.0
  %82 = vmatpush1.xpose.msra.mxu0 0.0
  %83 = vmatprep.subr.mxu0 0.0
  %84 = vmatpush1.xpose.msra.mxu0 0.0
  %85 = vmatprep.subr.mxu0 0.0
  %86 = vmatpush1.xpose.msra.mxu0 0.0
  %87 = vmatprep.subr.mxu0 0.0
  %88 = vmatpush1.xpose.msra.mxu0 0.0
  %89 = vmatprep.subr.mxu0 0.0
  %90 = vmatpush1.xpose.msra.mxu0 0.0
  %91 = vmatprep.subr.mxu0 0.0
  %92 = vmatpush1.xpose.msra.mxu0 0.0
  %93 = vmatprep.mubr.f32.mxu0 0.0
  %94 = vmatmul.mubr.f32.gmra.mrb[0].mxu0 %v24
  %v95 = vpop.f32.mrb[0].mxu0
  %v96 = vadd.f32 %v20, %v95
  %v97 = vpop.f32.mrb[0].mxu0
  %98 = vdwg.mxu0
  %v99 = vlaneseq
  %v100 = vshrl.u32 %v99, 7
  %vm101 = vcmp.lt.s32.totalorder %v100, 3
  %v102 = vsel %vm101, %v96, -inf
  %vm103 = vcmask 11264
  %v104 = vsel %vm103, %v102, -inf
  %v105 = vrot.slane %v104, 4
  %v106 = vmax.f32 %v104, %v105
  %v107 = vrot.slane %v106, 2
  %v108 = vmax.f32 %v106, %v107
  %v109 = vrot.slane %v108, 1
  %v110 = vmax.f32 %v108, %v109
  %v111 = vsub.f32 %v96, %v110
  %v112 = vsel %vm101, %v111, -inf
  %v113 = vmul.f32 %v112, 1.442695
  %v114 = vpow.pop %v113
  %v115 = vsel %vm103, %v114, 0.0
  %v116 = vrot.slane %v115, 4
  %v117 = vadd.f32 %v115, %v116
  %v118 = vrot.slane %v117, 2
  %v119 = vadd.f32 %v117, %v118
  %v120 = vrot.slane %v119, 1
  %v121 = vadd.f32 %v119, %v120
  %v122 = vrcp.pop %v121
  %v123 = vmul.f32 %v114, %v122
  %v124 = vsel %vm101, %v123, %v96
  %125 = vst.msk [vmem:[%s3] sm:$0xf] %vm103, %v124
  // Predicated region
  $region14: #{tpu_custom_call.1} parent=0 // pred_check
    _
  $region15: #{tpu_custom_call.1} parent=0 // pred_check_branch
    %127 = sbr.rel (0) target = $region17
  $region16: #{tpu_custom_call.1} parent=0 // pred_region
    _
  $region17: #{tpu_custom_call.1} parent=0 // pred_fallthru
    _
  // Predicated region
  $region18: #{tpu_custom_call.1} parent=0 // pred_check
    _
  $region19: #{tpu_custom_call.1} parent=0 // pred_check_branch
    %129 = sbr.rel (0) target = $region21
  $region20: #{tpu_custom_call.1} parent=0 // pred_region
    _
  $region21: #{tpu_custom_call.1} parent=0 // pred_fallthru
    _

</llo_original>
